<compile_context>
chip_gen: v7x
topology: tpu7x:2x2x1
jax: 0.10.0
libtpu: 0.0.40
codegen_flags: <defaults>
</compile_context>

<pallas_src>
import functools

import jax
import jax.numpy as jnp
from jax.experimental import pallas as pl
from jax.experimental.pallas import tpu as pltpu

_LANE = 128
_VMEM_LIMIT = 32 * 1024 * 1024
_BN_EPS = 1e-5


def _ceil_to(x, m):
    return ((x + m - 1) // m) * m


def _sigmoid(x):
    # Manual sigmoid: exp + div are the safest transcendental path in-kernel.
    return 1.0 / (1.0 + jnp.exp(-x))


# ----------------------------- Pallas kernels --------------------------------

def _rep_s1_chain_kernel(x_ref, mask_ref, w9_ref, b_ref, wd_ref, bd_ref,
                         wu_ref, bu_ref, o_ref, xbuf_ref, *,
                         wp, lead, l_rows, inv_cnt, nblocks):
    """Grid step = (sample n, block b) of a chain of fused stride-1 RepBlocks.

    x_ref  : (1, R, C)        flattened, spatially zero-padded input (bf16)
    mask   : (L, 1)           1.0 on valid output rows, 0.0 on overcomplete cols
    w9_ref : (B*9, C, Co)     per-block fused 3x3 taps, resident in VMEM (bf16)
    b_ref  : (B, 1, Co)       fused bias (f32)
    SE     : wd (B, Co, Cm), bd (B, 1, Cm), wu (B, Cm, Co), bu (B, 1, Co)
    o_ref  : (1, L, Co)       output (bf16), written on the last block
    xbuf   : (R, C)           VMEM scratch: current block's padded input
    """
    b = pl.program_id(1)

    @pl.when(b == 0)
    def _():
        xbuf_ref[...] = x_ref[0]

    co = o_ref.shape[2]
    acc = jnp.zeros((l_rows, co), jnp.float32)
    for t in range(9):
        off = lead + (t // 3) * wp + (t % 3)
        patch = xbuf_ref[off:off + l_rows, :]                 # (L, C) bf16
        acc = acc + jnp.dot(patch, w9_ref[b * 9 + t],
                            preferred_element_type=jnp.float32)
    # bias + mask out the overcomplete (spatial padding) columns
    y = (acc + b_ref[b]) * mask_ref[...]                      # (L, Co) f32

    # SE: global average pool over valid pixels -> down -> relu -> up -> gate
    pooled = (jnp.sum(y, axis=0, keepdims=True) * inv_cnt).astype(jnp.bfloat16)
    z = jnp.maximum(
        jnp.dot(pooled, wd_ref[b], preferred_element_type=jnp.float32)
        + bd_ref[b], 0.0)
    gate = _sigmoid(
        jnp.dot(z.astype(jnp.bfloat16), wu_ref[b],
                preferred_element_type=jnp.float32) + bu_ref[b])
    out = jnp.maximum(y * gate, 0.0)                          # final ReLU

    @pl.when(b == nblocks - 1)
    def _():
        o_ref[0] = out.astype(o_ref.dtype)

    @pl.when(b < nblocks - 1)
    def _():
        # Re-pad in place for the next block: rows [lead+wp+1, lead+wp+1+L)
        # hold the next padded flattened input; all other rows stay zero
        # (masked columns of `out` provide the left/right spatial padding).
        start = lead + wp + 1                                  # multiple of 8
        xbuf_ref[start:start + l_rows, :] = out.astype(xbuf_ref.dtype)


def _rep_s2_kernel(pat_ref, w_ref, b_ref, wd_ref, bd_ref, wu_ref, bu_ref,
                   o_ref, *, inv_cnt):
    # pat_ref: (1, HWo, K) bf16 im2col patches, w_ref: (K, Co) bf16
    pat = pat_ref[0]
    y = jnp.dot(pat, w_ref[...], preferred_element_type=jnp.float32) + b_ref[...]
    pooled = (jnp.sum(y, axis=0, keepdims=True) * inv_cnt).astype(jnp.bfloat16)
    z = jnp.maximum(
        jnp.dot(pooled, wd_ref[...], preferred_element_type=jnp.float32)
        + bd_ref[...], 0.0)
    gate = _sigmoid(
        jnp.dot(z.astype(jnp.bfloat16), wu_ref[...],
                preferred_element_type=jnp.float32) + bu_ref[...])
    o_ref[0] = jnp.maximum(y * gate, 0.0).astype(o_ref.dtype)


def _head_kernel(x_ref, w_ref, b_ref, o_ref):
    # x_ref: (TM, Cin) bf16, w_ref: (Cin, Co) bf16, b_ref: (1, Co) f32
    o_ref[...] = (jnp.dot(x_ref[...], w_ref[...],
                          preferred_element_type=jnp.float32)
                  + b_ref[...]).astype(o_ref.dtype)


# ------------------------------ kernel wrappers -------------------------------

def rep_s1_chain_forward(x, blocks):
    """Run a chain of stride-1 RepBlocks (same HxW, cin==cout) in one call."""
    N, H, W, C = x.shape
    B = len(blocks)
    co = blocks[0]["cp_out"]
    cm = blocks[0]["cp_mid"]
    assert all(blk["stride"] == 1 for blk in blocks)
    assert all(blk["cp_in"] == C and blk["cp_out"] == co for blk in blocks)

    wp, wo, ho = W + 2, W, H
    l_rows = ho * wp
    lead = (-(wp + 1)) % 8                 # aligns the in-place re-pad store
    r_rows = lead + (H + 3) * wp

    xp = jnp.pad(x.astype(jnp.bfloat16), ((0, 0), (1, 2), (1, 1), (0, 0)))
    xp = xp.reshape(N, (H + 3) * wp, C)
    xp = jnp.pad(xp, ((0, 0), (lead, 0), (0, 0)))

    mask = ((jnp.arange(l_rows) % wp) < wo).astype(jnp.float32)
    mask = mask.reshape(l_rows, 1)

    # Whole-chain weight stacks (resident in VMEM, fetched from HBM once).
    w9 = jnp.stack([blk["w9"] for blk in blocks]).reshape(B * 9, C, co)
    bb = jnp.stack([blk["b"] for blk in blocks])         # (B, 1, Co)
    wd = jnp.stack([blk["se_wd"] for blk in blocks])     # (B, Co, Cm)
    bd = jnp.stack([blk["se_bd"] for blk in blocks])     # (B, 1, Cm)
    wu = jnp.stack([blk["se_wu"] for blk in blocks])     # (B, Cm, Co)
    bu = jnp.stack([blk["se_bu"] for blk in blocks])     # (B, 1, Co)

    kernel = functools.partial(
        _rep_s1_chain_kernel, wp=wp, lead=lead, l_rows=l_rows,
        inv_cnt=1.0 / float(ho * wo), nblocks=B)

    flops = 2 * N * B * 9 * l_rows * C * co
    bytes_accessed = int(xp.size * 2 + w9.size * 2 + N * l_rows * co * 2
                         + (wd.size + wu.size) * 2 + bb.size * 4)
    const = lambda n, b: (0, 0, 0)

    out = pl.pallas_call(
        kernel,
        out_shape=jax.ShapeDtypeStruct((N, l_rows, co), jnp.bfloat16),
        grid=(N, B),
        in_specs=[
            pl.BlockSpec((1, r_rows, C), lambda n, b: (n, 0, 0)),
            pl.BlockSpec((l_rows, 1), lambda n, b: (0, 0)),
            pl.BlockSpec((B * 9, C, co), const),
            pl.BlockSpec((B, 1, co), const),
            pl.BlockSpec((B, co, cm), const),
            pl.BlockSpec((B, 1, cm), const),
            pl.BlockSpec((B, cm, co), const),
            pl.BlockSpec((B, 1, co), const),
        ],
        out_specs=pl.BlockSpec((1, l_rows, co), lambda n, b: (n, 0, 0)),
        scratch_shapes=[pltpu.VMEM((r_rows, C), jnp.bfloat16)],
        compiler_params=pltpu.CompilerParams(
            dimension_semantics=("parallel", "arbitrary"),
            vmem_limit_bytes=_VMEM_LIMIT),
        cost_estimate=pl.CostEstimate(
            flops=flops, transcendentals=N * B * co,
            bytes_accessed=bytes_accessed),
    )(xp, mask, w9, bb, wd, bd, wu, bu)
    # drop the overcomplete spatial-padding columns
    return out.reshape(N, ho, wp, co)[:, :, :wo, :]


def rep_s2_forward(x, p):
    """Single stride-2 RepBlock via bf16 im2col matmul (lane-dense output)."""
    N, H, W, _ = x.shape
    cin, co, cm = p["cin"], p["cp_out"], p["cp_mid"]
    x_t = x[..., :cin].astype(jnp.bfloat16)
    ho = (H + 2 - 3) // 2 + 1
    wo = (W + 2 - 3) // 2 + 1
    hwo = ho * wo
    K = 9 * cin

    xp = jnp.pad(x_t, ((0, 0), (1, 1), (1, 1), (0, 0)))
    cols = []
    for ky in range(3):
        for kx in range(3):
            cols.append(xp[:, ky:ky + (ho - 1) * 2 + 1:2,
                            kx:kx + (wo - 1) * 2 + 1:2, :])
    pat = jnp.concatenate(cols, axis=-1).reshape(N, hwo, K)

    out = pl.pallas_call(
        functools.partial(_rep_s2_kernel, inv_cnt=1.0 / float(hwo)),
        out_shape=jax.ShapeDtypeStruct((N, hwo, co), jnp.bfloat16),
        grid=(N,),
        in_specs=[
            pl.BlockSpec((1, hwo, K), lambda n: (n, 0, 0)),
            pl.BlockSpec((K, co), lambda n: (0, 0)),
            pl.BlockSpec((1, co), lambda n: (0, 0)),
            pl.BlockSpec((co, cm), lambda n: (0, 0)),
            pl.BlockSpec((1, cm), lambda n: (0, 0)),
            pl.BlockSpec((cm, co), lambda n: (0, 0)),
            pl.BlockSpec((1, co), lambda n: (0, 0)),
        ],
        out_specs=pl.BlockSpec((1, hwo, co), lambda n: (n, 0, 0)),
        compiler_params=pltpu.CompilerParams(
            dimension_semantics=("parallel",),
            vmem_limit_bytes=_VMEM_LIMIT),
        cost_estimate=pl.CostEstimate(
            flops=2 * N * hwo * K * co, transcendentals=N * co,
            bytes_accessed=int(pat.size * 2 + K * co * 2 + N * hwo * co * 2)),
    )(pat, p["w"], p["b"], p["se_wd"], p["se_bd"], p["se_wu"], p["se_bu"])
    return out.reshape(N, ho, wo, co)


def head_forward(xh, xl_up, w_pad, b_pad, num_classes):
    x_cat = jnp.concatenate([xh.astype(jnp.bfloat16),
                             xl_up.astype(jnp.bfloat16)], axis=-1)
    N, H, W, C = x_cat.shape
    cop = w_pad.shape[1]
    M = N * H * W
    tm = 256 if M >= 256 else max(8, _ceil_to(M, 8))
    mp = _ceil_to(M, tm)
    xf = jnp.pad(x_cat.reshape(M, C), ((0, mp - M), (0, 0)))

    out = pl.pallas_call(
        _head_kernel,
        out_shape=jax.ShapeDtypeStruct((mp, cop), jnp.float32),
        grid=(mp // tm,),
        in_specs=[
            pl.BlockSpec((tm, C), lambda i: (i, 0)),
            pl.BlockSpec((C, cop), lambda i: (0, 0)),
            pl.BlockSpec((1, cop), lambda i: (0, 0)),
        ],
        out_specs=pl.BlockSpec((tm, cop), lambda i: (i, 0)),
        compiler_params=pltpu.CompilerParams(
            dimension_semantics=("parallel",),
            vmem_limit_bytes=_VMEM_LIMIT),
        cost_estimate=pl.CostEstimate(
            flops=2 * mp * C * cop, transcendentals=0,
            bytes_accessed=int(xf.size * 2 + C * cop * 2 + mp * cop * 4)),
    )(xf, w_pad, b_pad)
    return out[:M, :num_classes].reshape(N, H, W, num_classes)


# ----------------------- plain-JAX glue (non hot-path) ------------------------

def upsample_bilinear_align_corners(x_nhwc, out_h, out_w):
    """F.interpolate(mode='bilinear', align_corners=True); identity if same."""
    n, h, w, c = x_nhwc.shape
    if h == out_h and w == out_w:
        return x_nhwc

    def src_coords(in_size, out_size):
        if out_size == 1:
            return jnp.zeros((out_size,), jnp.float32)
        scale = (in_size - 1) / (out_size - 1)
        return jnp.arange(out_size, dtype=jnp.float32) * scale

    ys = src_coords(h, out_h)
    xs = src_coords(w, out_w)
    y0 = jnp.clip(jnp.floor(ys).astype(jnp.int32), 0, h - 1)
    y1 = jnp.clip(y0 + 1, 0, h - 1)
    x0 = jnp.clip(jnp.floor(xs).astype(jnp.int32), 0, w - 1)
    x1 = jnp.clip(x0 + 1, 0, w - 1)
    wy = (ys - y0.astype(jnp.float32))[None, :, None, None]
    wx = (xs - x0.astype(jnp.float32))[None, None, :, None]
    r0 = x_nhwc[:, y0, :, :]
    r1 = x_nhwc[:, y1, :, :]
    top = r0[:, :, x0, :] * (1.0 - wx) + r0[:, :, x1, :] * wx
    bot = r1[:, :, x0, :] * (1.0 - wx) + r1[:, :, x1, :] * wx
    return top * (1.0 - wy) + bot * wy


# ----------------------------- parameter setup --------------------------------

def _bn_init(key, c):
    k1, k2, k3, k4 = jax.random.split(key, 4)
    gamma = jax.random.uniform(k1, (c,), jnp.float32, 0.5, 1.5)
    beta = 0.1 * jax.random.normal(k2, (c,), jnp.float32)
    mean = 0.1 * jax.random.normal(k3, (c,), jnp.float32)
    var = jax.random.uniform(k4, (c,), jnp.float32, 0.5, 1.5)
    return gamma, beta, mean, var


def _fold_bn(kernel_oihw, gamma, beta, mean, var, eps=_BN_EPS):
    std = jnp.sqrt(var + eps)
    t = gamma / std
    return kernel_oihw * t[:, None, None, None], beta - mean * t


def init_repblock_params(key, cin, cout, stride):
    kd, kdb, k1, k1b, kid, ks1, ks2 = jax.random.split(key, 7)
    w3 = jax.random.normal(kd, (cout, cin, 3, 3), jnp.float32) / jnp.sqrt(9.0 * cin)
    w1 = jax.random.normal(k1, (cout, cin, 1, 1), jnp.float32) / jnp.sqrt(1.0 * cin)
    k3f, b3 = _fold_bn(w3, *_bn_init(kdb, cout))
    k1f, b1 = _fold_bn(w1, *_bn_init(k1b, cout))
    kernel = k3f + jnp.pad(k1f, ((0, 0), (0, 0), (1, 1), (1, 1)))
    bias = b3 + b1
    if cin == cout and stride == 1:   # rbr_identity branch exists
        idk = jnp.zeros((cin, cin, 3, 3), jnp.float32)
        idk = idk.at[jnp.arange(cin), jnp.arange(cin), 1, 1].set(1.0)
        kidf, bid = _fold_bn(idk, *_bn_init(kid, cin))
        kernel = kernel + kidf
        bias = bias + bid

    cp_in, cp_out = _ceil_to(cin, _LANE), _ceil_to(cout, _LANE)
    cmid = max(cout // 8, 1)
    cp_mid = _ceil_to(cmid, _LANE)

    se_wd = jax.random.normal(ks1, (cout, cmid), jnp.float32) / jnp.sqrt(1.0 * cout)
    se_bd = 0.1 * jax.random.normal(jax.random.fold_in(ks1, 1), (cmid,), jnp.float32)
    se_wu = jax.random.normal(ks2, (cmid, cout), jnp.float32) / jnp.sqrt(1.0 * cmid)
    se_bu = 0.1 * jax.random.normal(jax.random.fold_in(ks2, 1), (cout,), jnp.float32)

    p = dict(stride=stride, cin=cin, cout=cout,
             cp_in=cp_in, cp_out=cp_out, cp_mid=cp_mid)
    # OIHW -> (ky, kx, ci, co): matches in-kernel tap / im2col ordering.
    wk = jnp.transpose(kernel, (2, 3, 1, 0))
    if stride == 1:
        w9 = wk.reshape(9, cin, cout)
        p["w9"] = jnp.pad(w9, ((0, 0), (0, cp_in - cin),
                               (0, cp_out - cout))).astype(jnp.bfloat16)
    else:
        w_mat = wk.reshape(9 * cin, cout)
        p["w"] = jnp.pad(w_mat, ((0, 0), (0, cp_out - cout))).astype(jnp.bfloat16)
    # zero-padded output channels / bias keep padded lanes exactly 0.
    p["b"] = jnp.pad(bias, (0, cp_out - cout)).reshape(1, cp_out)
    p["se_wd"] = jnp.pad(se_wd, ((0, cp_out - cout),
                                 (0, cp_mid - cmid))).astype(jnp.bfloat16)
    p["se_bd"] = jnp.pad(se_bd, (0, cp_mid - cmid)).reshape(1, cp_mid)
    p["se_wu"] = jnp.pad(se_wu, ((0, cp_mid - cmid),
                                 (0, cp_out - cout))).astype(jnp.bfloat16)
    p["se_bu"] = jnp.pad(se_bu, (0, cp_out - cout)).reshape(1, cp_out)
    return p


def init_basenet(key, depths, channels, in_channel=3):
    stage_strides = [2, 2, 2, 2, 1]
    stages = []
    for si, (d, c) in enumerate(zip(depths, channels)):
        strides = [stage_strides[si]] + [1] * (d - 1)
        blocks = []
        for s in strides:
            key, sub = jax.random.split(key)
            blocks.append(init_repblock_params(sub, in_channel, c, s))
            in_channel = c
        stages.append(blocks)
    return stages


def make_head_params(head_w, head_b, c_true, c_pad, num_classes):
    co_pad = _ceil_to(num_classes, _LANE)
    w = jnp.zeros((2 * c_pad, co_pad), jnp.float32)
    w = w.at[:c_true, :num_classes].set(head_w[:c_true])
    w = w.at[c_pad:c_pad + c_true, :num_classes].set(head_w[c_true:2 * c_true])
    b = jnp.zeros((1, co_pad), jnp.float32)
    b = b.at[0, :num_classes].set(head_b)
    return w.astype(jnp.bfloat16), b


# ------------------------------- RepLPS forward -------------------------------

def run_basenet_stages(x, stages, stage_ids):
    for si in stage_ids:
        blocks = stages[si]
        if blocks[0]["stride"] == 2:
            x = rep_s2_forward(x, blocks[0])
            tail = blocks[1:]
        else:
            tail = blocks
        if tail:
            x = rep_s1_chain_forward(x, tail)
    return x


def replps_forward(x_nchw, params, res=(1.0, 0.25)):
    n, c, h, w = x_nchw.shape
    x = jnp.transpose(x_nchw, (0, 2, 3, 1))  # NCHW -> NHWC

    xh = upsample_bilinear_align_corners(x, int(h * res[0]), int(w * res[0]))
    xl = upsample_bilinear_align_corners(x, int(h * res[1]), int(w * res[1]))

    # BaseNet.forward runs stages 0..2
    xh = run_basenet_stages(xh, params["path0"], (0, 1, 2))
    xl = run_basenet_stages(xl, params["path1"], (0, 1, 2))
    # bi_interaction(xh, xl): results discarded in the reference -> skipped
    xh = run_basenet_stages(xh, params["path0"], (3,))
    xl = run_basenet_stages(xl, params["path1"], (3,))
    # second bi_interaction also discarded
    xh = run_basenet_stages(xh, params["path0"], (4,))
    xl = run_basenet_stages(xl, params["path1"], (4,))

    xl_up = upsample_bilinear_align_corners(xl, xh.shape[1], xh.shape[2])
    y = head_forward(xh, xl_up, params["head_w_pad"], params["head_b_pad"],
                     params["num_classes"])
    y = upsample_bilinear_align_corners(y, h, w)
    return jnp.transpose(y, (0, 3, 1, 2))  # NHWC -> NCHW


# ------------------------------------ main ------------------------------------

if __name__ == "__main__":
    depths = [1, 3, 3, 10, 10]
    channels = [8, 24, 48, 96, 96]
    num_classes = 2

    key = jax.random.PRNGKey(0)
    kx, kp0, kp1, khw, khb = jax.random.split(key, 5)
    head_w = jax.random.normal(khw, (channels[-1] * 2, num_classes),
                               jnp.float32) / jnp.sqrt(channels[-1] * 2.0)
    head_b = 0.1 * jax.random.normal(khb, (num_classes,), jnp.float32)
    hw_pad, hb_pad = make_head_params(head_w, head_b, channels[-1], _LANE,
                                      num_classes)
    params = {
        "path0": init_basenet(kp0, depths, channels),
        "path1": init_basenet(kp1, depths, channels),
        "head_w_pad": hw_pad,
        "head_b_pad": hb_pad,
        "num_classes": num_classes,
    }

    # small deterministic input: N=2, C=3 (RGB per BaseNet), H=W=16
    x = jax.random.normal(kx, (2, 3, 16, 16), jnp.float32)

    out = replps_forward(x, params)
    out = jax.block_until_ready(out)
    assert out.shape == (2, num_classes, 16, 16), out.shape
    assert bool(jnp.all(jnp.isfinite(out)))
    print("KERNEL_OK")
</pallas_src>

<mosaic_0001>
module attributes {stable_mosaic.version = 11 : i64} {
  func.func @_rep_s2_kernel(%arg0: i32, %arg1: memref<1x64x27xbf16, #tpu.memory_space<vmem>>, %arg2: memref<27x128xbf16, #tpu.memory_space<vmem>>, %arg3: memref<1x128xf32, #tpu.memory_space<vmem>>, %arg4: memref<128x128xbf16, #tpu.memory_space<vmem>>, %arg5: memref<1x128xf32, #tpu.memory_space<vmem>>, %arg6: memref<128x128xbf16, #tpu.memory_space<vmem>>, %arg7: memref<1x128xf32, #tpu.memory_space<vmem>>, %arg8: memref<1x64x128xbf16, #tpu.memory_space<vmem>>) attributes {dimension_semantics = [#tpu.dimension_semantics<parallel>], iteration_bounds = array<i64: 2>, scalar_prefetch = 0 : i64, scratch_operands = 0 : i64, tpu.core_type = #tpu.core_type<tc>, window_params = [{transform_indices = @transform_0, window_bounds = array<i64: 1, 64, 27>}, {pipeline_mode = #tpu.pipeline_mode<synchronous>, transform_indices = @transform_1, window_bounds = array<i64: 27, 128>}, {pipeline_mode = #tpu.pipeline_mode<synchronous>, transform_indices = @transform_2, window_bounds = array<i64: 1, 128>}, {pipeline_mode = #tpu.pipeline_mode<synchronous>, transform_indices = @transform_3, window_bounds = array<i64: 128, 128>}, {pipeline_mode = #tpu.pipeline_mode<synchronous>, transform_indices = @transform_4, window_bounds = array<i64: 1, 128>}, {pipeline_mode = #tpu.pipeline_mode<synchronous>, transform_indices = @transform_5, window_bounds = array<i64: 128, 128>}, {pipeline_mode = #tpu.pipeline_mode<synchronous>, transform_indices = @transform_6, window_bounds = array<i64: 1, 128>}, {transform_indices = @transform_7, window_bounds = array<i64: 1, 64, 128>}]} {
    %c0 = arith.constant 0 : index
    %c0_0 = arith.constant 0 : index
    %c0_1 = arith.constant 0 : index
    %0 = vector.load %arg1[%c0, %c0_0, %c0_1] : memref<1x64x27xbf16, #tpu.memory_space<vmem>>, vector<1x64x27xbf16>
    %1 = vector.shape_cast %0 : vector<1x64x27xbf16> to vector<64x27xbf16>
    %c0_2 = arith.constant 0 : index
    %c0_3 = arith.constant 0 : index
    %2 = vector.load %arg2[%c0_2, %c0_3] : memref<27x128xbf16, #tpu.memory_space<vmem>>, vector<27x128xbf16>
    %cst = arith.constant dense<0.000000e+00> : vector<64x128xf32>
    %3 = tpu.matmul %1, %2, %cst {dimension_numbers = #tpu.dot_dimension_numbers<[1], [0], [0], [1], [0, 0, 1, 1], [], []>} : vector<64x27xbf16>, vector<27x128xbf16>, vector<64x128xf32> -> vector<64x128xf32>
    %c0_4 = arith.constant 0 : index
    %c0_5 = arith.constant 0 : index
    %4 = vector.load %arg3[%c0_4, %c0_5] : memref<1x128xf32, #tpu.memory_space<vmem>>, vector<1x128xf32>
    %5 = vector.broadcast %4 : vector<1x128xf32> to vector<64x128xf32>
    %6 = arith.addf %3, %5 : vector<64x128xf32>
    %cst_6 = arith.constant dense<0.000000e+00> : vector<128xf32>
    %7 = vector.multi_reduction <add>, %6, %cst_6 [0] : vector<64x128xf32> to vector<128xf32>
    %8 = vector.shape_cast %7 : vector<128xf32> to vector<1x128xf32>
    %cst_7 = arith.constant 1.562500e-02 : f32
    %9 = vector.broadcast %cst_7 : f32 to vector<1x128xf32>
    %10 = arith.mulf %8, %9 : vector<1x128xf32>
    %11 = arith.truncf %10 : vector<1x128xf32> to vector<1x128xbf16>
    %c0_8 = arith.constant 0 : index
    %c0_9 = arith.constant 0 : index
    %12 = vector.load %arg4[%c0_8, %c0_9] : memref<128x128xbf16, #tpu.memory_space<vmem>>, vector<128x128xbf16>
    %cst_10 = arith.constant dense<0.000000e+00> : vector<1x128xf32>
    %13 = tpu.matmul %11, %12, %cst_10 {dimension_numbers = #tpu.dot_dimension_numbers<[1], [0], [0], [1], [0, 0, 1, 1], [], []>} : vector<1x128xbf16>, vector<128x128xbf16>, vector<1x128xf32> -> vector<1x128xf32>
    %c0_11 = arith.constant 0 : index
    %c0_12 = arith.constant 0 : index
    %14 = vector.load %arg5[%c0_11, %c0_12] : memref<1x128xf32, #tpu.memory_space<vmem>>, vector<1x128xf32>
    %15 = arith.addf %13, %14 : vector<1x128xf32>
    %cst_13 = arith.constant 0.000000e+00 : f32
    %16 = vector.broadcast %cst_13 : f32 to vector<1x128xf32>
    %17 = arith.maximumf %15, %16 : vector<1x128xf32>
    %18 = arith.truncf %17 : vector<1x128xf32> to vector<1x128xbf16>
    %c0_14 = arith.constant 0 : index
    %c0_15 = arith.constant 0 : index
    %19 = vector.load %arg6[%c0_14, %c0_15] : memref<128x128xbf16, #tpu.memory_space<vmem>>, vector<128x128xbf16>
    %cst_16 = arith.constant dense<0.000000e+00> : vector<1x128xf32>
    %20 = tpu.matmul %18, %19, %cst_16 {dimension_numbers = #tpu.dot_dimension_numbers<[1], [0], [0], [1], [0, 0, 1, 1], [], []>} : vector<1x128xbf16>, vector<128x128xbf16>, vector<1x128xf32> -> vector<1x128xf32>
    %c0_17 = arith.constant 0 : index
    %c0_18 = arith.constant 0 : index
    %21 = vector.load %arg7[%c0_17, %c0_18] : memref<1x128xf32, #tpu.memory_space<vmem>>, vector<1x128xf32>
    %22 = arith.addf %20, %21 : vector<1x128xf32>
    %cst_19 = arith.constant 0.000000e+00 : f32
    %23 = vector.broadcast %cst_19 : f32 to vector<1x128xf32>
    %24 = arith.subf %23, %22 : vector<1x128xf32>
    %25 = math.exp %24 : vector<1x128xf32>
    %cst_20 = arith.constant 1.000000e+00 : f32
    %26 = vector.broadcast %cst_20 : f32 to vector<1x128xf32>
    %27 = arith.addf %26, %25 : vector<1x128xf32>
    %cst_21 = arith.constant 1.000000e+00 : f32
    %28 = vector.broadcast %cst_21 : f32 to vector<1x128xf32>
    %29 = arith.divf %28, %27 : vector<1x128xf32>
    %30 = vector.broadcast %29 : vector<1x128xf32> to vector<64x128xf32>
    %31 = arith.mulf %6, %30 : vector<64x128xf32>
    %cst_22 = arith.constant 0.000000e+00 : f32
    %32 = vector.broadcast %cst_22 : f32 to vector<64x128xf32>
    %33 = arith.maximumf %31, %32 : vector<64x128xf32>
    %34 = arith.truncf %33 : vector<64x128xf32> to vector<64x128xbf16>
    %c0_23 = arith.constant 0 : index
    %c0_24 = arith.constant 0 : index
    %c0_25 = arith.constant 0 : index
    %35 = vector.load %arg8[%c0_23, %c0_24, %c0_25] : memref<1x64x128xbf16, #tpu.memory_space<vmem>>, vector<1x64x128xbf16>
    %36 = vector.shape_cast %35 : vector<1x64x128xbf16> to vector<64x128xbf16>
    %37 = vector.shape_cast %34 : vector<64x128xbf16> to vector<1x64x128xbf16>
    tpu.vector_store %arg8[%c0_23, %c0_24, %c0_25], %37 {strides = array<i32>} : memref<1x64x128xbf16, #tpu.memory_space<vmem>>, vector<1x64x128xbf16>,
    return
  }
  func.func @transform_0(%arg0: i32) -> (i32, i32, i32) {
    %c0_i32 = arith.constant 0 : i32
    %c0_i32_0 = arith.constant 0 : i32
    %c0_i32_1 = arith.constant 0 : i32
    return %arg0, %c0_i32, %c0_i32_0 : i32, i32, i32
  }
  func.func @transform_1(%arg0: i32) -> (i32, i32) {
    %c0_i32 = arith.constant 0 : i32
    %c0_i32_0 = arith.constant 0 : i32
    %c0_i32_1 = arith.constant 0 : i32
    return %c0_i32, %c0_i32_0 : i32, i32
  }
  func.func @transform_2(%arg0: i32) -> (i32, i32) {
    %c0_i32 = arith.constant 0 : i32
    %c0_i32_0 = arith.constant 0 : i32
    %c0_i32_1 = arith.constant 0 : i32
    return %c0_i32, %c0_i32_0 : i32, i32
  }
  func.func @transform_3(%arg0: i32) -> (i32, i32) {
    %c0_i32 = arith.constant 0 : i32
    %c0_i32_0 = arith.constant 0 : i32
    %c0_i32_1 = arith.constant 0 : i32
    return %c0_i32, %c0_i32_0 : i32, i32
  }
  func.func @transform_4(%arg0: i32) -> (i32, i32) {
    %c0_i32 = arith.constant 0 : i32
    %c0_i32_0 = arith.constant 0 : i32
    %c0_i32_1 = arith.constant 0 : i32
    return %c0_i32, %c0_i32_0 : i32, i32
  }
  func.func @transform_5(%arg0: i32) -> (i32, i32) {
    %c0_i32 = arith.constant 0 : i32
    %c0_i32_0 = arith.constant 0 : i32
    %c0_i32_1 = arith.constant 0 : i32
    return %c0_i32, %c0_i32_0 : i32, i32
  }
  func.func @transform_6(%arg0: i32) -> (i32, i32) {
    %c0_i32 = arith.constant 0 : i32
    %c0_i32_0 = arith.constant 0 : i32
    %c0_i32_1 = arith.constant 0 : i32
    return %c0_i32, %c0_i32_0 : i32, i32
  }
  func.func @transform_7(%arg0: i32) -> (i32, i32, i32) {
    %c0_i32 = arith.constant 0 : i32
    %c0_i32_0 = arith.constant 0 : i32
    %c0_i32_1 = arith.constant 0 : i32
    return %arg0, %c0_i32, %c0_i32_0 : i32, i32, i32
  }
}

</mosaic_0001>

<llo_original>
// kernel: tpu_custom_call.1
$region0: #{tpu_custom_call.1}
  #allocation0 [shape = 'u32[]', space=smem, size = 0x4, offset = 0x4, fixed_abs, tag = 'smem constant byte address 0x4 - core index']
  #allocation1 [shape = 'u32[144,128]{1,0:T(1,128)}', space=vmem, size = 0x12000, scoped, tag = 'internal scratch']
  %s0 = inlined_call_operand.vmem [shape: bf16[2,64,27], index: 0, kind: input, shape index: {}]
  %s1 = inlined_call_operand.vmem [shape: bf16[27,128], index: 1, kind: input, shape index: {}]
  %s2 = inlined_call_operand.vmem [shape: f32[1,128], index: 2, kind: input, shape index: {}]
  %s3 = inlined_call_operand.vmem [shape: bf16[128,128], index: 3, kind: input, shape index: {}]
  %s4 = inlined_call_operand.vmem [shape: f32[1,128], index: 4, kind: input, shape index: {}]
  %s5 = inlined_call_operand.hbm [shape: bf16[128,128], index: 5, kind: input, shape index: {}]
  %s6 = inlined_call_operand.vmem [shape: f32[1,128], index: 6, kind: input, shape index: {}]
  %s7 = inlined_call_operand.hbm [shape: bf16[2,64,128], index: 7, kind: output, shape index: {}]
  %s8 = sld [smem:[#allocation0]]
  $region65: #{tpu_custom_call.1} parent=0
    _
  %s10 = ssub.s32 1, %s8
  %s11 = scalar_select 0, %s10, %s8
  $region1: #{tpu_custom_call.1} parent=0
    #allocation2 [shape = 'u8[32768]{0}', space=vmem, size = 0x8000, scoped, tag = 'input window, operand 5, single buffered']
    #allocation3 [shape = 's32[2]{0}', space=sflag, size = 0x8, scoped, tag = 'scoped memory for tpu_custom_call.1']
    #allocation4 [shape = 's32[2]{0}', space=sflag, size = 0x8, scoped, tag = 'scoped memory for tpu_custom_call.1']
    #allocation5 [shape = 'u8[32768]{0}', space=vmem, size = 0x8000, scoped, tag = 'output window, operand 0']
    %12 = vsyncpa [#allocation3], 0
    %13 = vsyncpa [#allocation4], 0
    %s14 = scalar_lea.sflag [#allocation4], 1
    %15 = vsyncpa %s14, 0
    loop: start=0, step=1, limit=4
    $region2: #{tpu_custom_call.1} parent=1 // loop_pre_header
      _
    $region3: #{tpu_custom_call.1} parent=1 // loop_header
      %s17 = sphi 0, %s21
      %p18 = scmp.ge.s32.totalorder %s17, 4
      %s27 = sphi 0, %s29
      %s30 = sphi 0, %s27
      %s31 = sphi 0, %s30
      %s47 = sphi 0, %s31
      %s51 = sphi 0, %s51
      %s53 = sphi 0, %s51
      %s54 = sphi 0, %s53
      %s68 = sphi 0, %s54
      %s72 = sphi 0, %s72
      %s74 = sphi 0, %s72
      %s75 = sphi 0, %s74
      %s89 = sphi 0, %s75
      %s93 = sphi 0, %s93
      %s95 = sphi 0, %s93
      %s96 = sphi 0, %s95
      %s110 = sphi 0, %s96
      %s114 = sphi 0, %s114
      %s116 = sphi 0, %s114
      %s117 = sphi 0, %s116
      %s131 = sphi 0, %s117
      %s135 = sphi 0, %s135
      %s137 = sphi 0, %s135
      %s138 = sphi 0, %s137
      %s152 = sphi 0, %s138
      %s156 = sphi 0, %s156
      %s158 = sphi 0, %s156
      %s159 = sphi 0, %s158
      %s173 = sphi 0, %s159
      %s179 = sphi 0, %s181
      %s182 = sphi 0, %s179
      %s183 = sphi 0, %s182
      %s199 = sphi 0, %s183
    $region4: #{tpu_custom_call.1} parent=1 // loop_header_branch
      %20 = sbr.rel (%p18) target = $region8
    $region5: #{tpu_custom_call.1} parent=1 // loop_body
      %s22 = ssub.s32 %s17, 1
      %s23 = ssub.s32 %s17, 2
      %s24 = sadd.s32 %s17, 1
      %s25 = ssub.s32 %s17, %s24
      %p26 = scmp.eq.s32.totalorder %s25, 0
      %s28 = sadd.s32 %s27, 1
      %s29 = scalar_select %p26, %s27, %s28
      %p32 = pneg %p26
      %p33 = scmp.eq.s32.totalorder %s17, 1
      %p34 = por %p32, %p33
      %p35 = scmp.ne.s32.totalorder %s27, %s30
      %p36 = scmp.eq.s32.totalorder %s17, 0
      %p37 = por %p35, %p36
      %p38 = scmp.ne.s32.totalorder %s27, %s30
      %p39 = scmp.eq.s32.totalorder %s22, 1
      %p40 = por %p38, %p39
      %p41 = scmp.ne.s32.totalorder %s30, %s31
      %p42 = scmp.eq.s32.totalorder %s22, 0
      %p43 = por %p41, %p42
      %p44 = scmp.ne.s32.totalorder %s30, %s31
      %p45 = scmp.eq.s32.totalorder %s23, 1
      %p46 = por %p44, %p45
      %p48 = scmp.ne.s32.totalorder %s31, %s47
      %p49 = scmp.eq.s32.totalorder %s23, 0
      %p50 = por %p48, %p49
      %s52 = sadd.s32 %s51, 1
      %p55 = scmp.eq.s32.totalorder %s17, 1
      %p56 = scmp.ne.s32.totalorder %s51, %s53
      %p57 = scmp.eq.s32.totalorder %s17, 0
      %p58 = por %p56, %p57
      %p59 = scmp.ne.s32.totalorder %s51, %s53
      %p60 = scmp.eq.s32.totalorder %s22, 1
      %p61 = por %p59, %p60
      %p62 = scmp.ne.s32.totalorder %s53, %s54
      %p63 = scmp.eq.s32.totalorder %s22, 0
      %p64 = por %p62, %p63
      %p65 = scmp.ne.s32.totalorder %s53, %s54
      %p66 = scmp.eq.s32.totalorder %s23, 1
      %p67 = por %p65, %p66
      %p69 = scmp.ne.s32.totalorder %s54, %s68
      %p70 = scmp.eq.s32.totalorder %s23, 0
      %p71 = por %p69, %p70
      %s73 = sadd.s32 %s72, 1
      %p76 = scmp.eq.s32.totalorder %s17, 1
      %p77 = scmp.ne.s32.totalorder %s72, %s74
      %p78 = scmp.eq.s32.totalorder %s17, 0
      %p79 = por %p77, %p78
      %p80 = scmp.ne.s32.totalorder %s72, %s74
      %p81 = scmp.eq.s32.totalorder %s22, 1
      %p82 = por %p80, %p81
      %p83 = scmp.ne.s32.totalorder %s74, %s75
      %p84 = scmp.eq.s32.totalorder %s22, 0
      %p85 = por %p83, %p84
      %p86 = scmp.ne.s32.totalorder %s74, %s75
      %p87 = scmp.eq.s32.totalorder %s23, 1
      %p88 = por %p86, %p87
      %p90 = scmp.ne.s32.totalorder %s75, %s89
      %p91 = scmp.eq.s32.totalorder %s23, 0
      %p92 = por %p90, %p91
      %s94 = sadd.s32 %s93, 1
      %p97 = scmp.eq.s32.totalorder %s17, 1
      %p98 = scmp.ne.s32.totalorder %s93, %s95
      %p99 = scmp.eq.s32.totalorder %s17, 0
      %p100 = por %p98, %p99
      %p101 = scmp.ne.s32.totalorder %s93, %s95
      %p102 = scmp.eq.s32.totalorder %s22, 1
      %p103 = por %p101, %p102
      %p104 = scmp.ne.s32.totalorder %s95, %s96
      %p105 = scmp.eq.s32.totalorder %s22, 0
      %p106 = por %p104, %p105
      %p107 = scmp.ne.s32.totalorder %s95, %s96
      %p108 = scmp.eq.s32.totalorder %s23, 1
      %p109 = por %p107, %p108
      %p111 = scmp.ne.s32.totalorder %s96, %s110
      %p112 = scmp.eq.s32.totalorder %s23, 0
      %p113 = por %p111, %p112
      %s115 = sadd.s32 %s114, 1
      %p118 = scmp.eq.s32.totalorder %s17, 1
      %p119 = scmp.ne.s32.totalorder %s114, %s116
      %p120 = scmp.eq.s32.totalorder %s17, 0
      %p121 = por %p119, %p120
      %p122 = scmp.ne.s32.totalorder %s114, %s116
      %p123 = scmp.eq.s32.totalorder %s22, 1
      %p124 = por %p122, %p123
      %p125 = scmp.ne.s32.totalorder %s116, %s117
      %p126 = scmp.eq.s32.totalorder %s22, 0
      %p127 = por %p125, %p126
      %p128 = scmp.ne.s32.totalorder %s116, %s117
      %p129 = scmp.eq.s32.totalorder %s23, 1
      %p130 = por %p128, %p129
      %p132 = scmp.ne.s32.totalorder %s117, %s131
      %p133 = scmp.eq.s32.totalorder %s23, 0
      %p134 = por %p132, %p133
      %s136 = sadd.s32 %s135, 1
      %p139 = scmp.eq.s32.totalorder %s17, 1
      %p140 = scmp.ne.s32.totalorder %s135, %s137
      %p141 = scmp.eq.s32.totalorder %s17, 0
      %p142 = por %p140, %p141
      %p143 = scmp.ne.s32.totalorder %s135, %s137
      %p144 = scmp.eq.s32.totalorder %s22, 1
      %p145 = por %p143, %p144
      %p146 = scmp.ne.s32.totalorder %s137, %s138
      %p147 = scmp.eq.s32.totalorder %s22, 0
      %p148 = por %p146, %p147
      %p149 = scmp.ne.s32.totalorder %s137, %s138
      %p150 = scmp.eq.s32.totalorder %s23, 1
      %p151 = por %p149, %p150
      %p153 = scmp.ne.s32.totalorder %s138, %s152
      %p154 = scmp.eq.s32.totalorder %s23, 0
      %p155 = por %p153, %p154
      %s157 = sadd.s32 %s156, 1
      %p160 = scmp.eq.s32.totalorder %s17, 1
      %p161 = scmp.ne.s32.totalorder %s156, %s158
      %p162 = scmp.eq.s32.totalorder %s17, 0
      %p163 = por %p161, %p162
      %p164 = scmp.ne.s32.totalorder %s156, %s158
      %p165 = scmp.eq.s32.totalorder %s22, 1
      %p166 = por %p164, %p165
      %p167 = scmp.ne.s32.totalorder %s158, %s159
      %p168 = scmp.eq.s32.totalorder %s22, 0
      %p169 = por %p167, %p168
      %p170 = scmp.ne.s32.totalorder %s158, %s159
      %p171 = scmp.eq.s32.totalorder %s23, 1
      %p172 = por %p170, %p171
      %p174 = scmp.ne.s32.totalorder %s159, %s173
      %p175 = scmp.eq.s32.totalorder %s23, 0
      %p176 = por %p174, %p175
      %s177 = ssub.s32 %s17, %s24
      %p178 = scmp.eq.s32.totalorder %s177, 0
      %s180 = sadd.s32 %s179, 1
      %s181 = scalar_select %p178, %s179, %s180
      %p184 = pneg %p178
      %p185 = scmp.eq.s32.totalorder %s17, 1
      %p186 = por %p184, %p185
      %p187 = scmp.ne.s32.totalorder %s179, %s182
      %p188 = scmp.eq.s32.totalorder %s17, 0
      %p189 = por %p187, %p188
      %p190 = scmp.ne.s32.totalorder %s179, %s182
      %p191 = scmp.eq.s32.totalorder %s22, 1
      %p192 = por %p190, %p191
      %p193 = scmp.ne.s32.totalorder %s182, %s183
      %p194 = scmp.eq.s32.totalorder %s22, 0
      %p195 = por %p193, %p194
      %p196 = scmp.ne.s32.totalorder %s182, %s183
      %p197 = scmp.eq.s32.totalorder %s23, 1
      %p198 = por %p196, %p197
      %p200 = scmp.ne.s32.totalorder %s183, %s199
      %p201 = scmp.eq.s32.totalorder %s23, 0
      %p202 = por %p200, %p201
      %p203 = scmp.le.s32.totalorder 1, %s17
      %p204 = scmp.lt.s32.totalorder %s17, 3
      %p205 = pnand %p203, %p204
      %p206 = pneg %p205
      // Predicated region
      $region9: #{tpu_custom_call.1} parent=5 // pred_check
        _
      $region10: #{tpu_custom_call.1} parent=5 // pred_check_branch
        %208 = sbr.rel (%p205) target = $region12
      $region11: #{tpu_custom_call.1} parent=5 // pred_region
        %s209 = ssub.s32 %s17, 1
        // Predicated region
        $region13: #{tpu_custom_call.1} parent=11 // pred_check
          %p210 = pneg %p64
        $region14: #{tpu_custom_call.1} parent=11 // pred_check_branch
          %212 = sbr.rel (%p210) target = $region16
        $region15: #{tpu_custom_call.1} parent=11 // pred_region
          _
        $region16: #{tpu_custom_call.1} parent=11 // pred_fallthru
          _
        // Predicated region
        $region17: #{tpu_custom_call.1} parent=11 // pred_check
          %p213 = pneg %p85
        $region18: #{tpu_custom_call.1} parent=11 // pred_check_branch
          %215 = sbr.rel (%p213) target = $region20
        $region19: #{tpu_custom_call.1} parent=11 // pred_region
          _
        $region20: #{tpu_custom_call.1} parent=11 // pred_fallthru
          _
        // Predicated region
        $region21: #{tpu_custom_call.1} parent=11 // pred_check
          %p216 = pneg %p106
        $region22: #{tpu_custom_call.1} parent=11 // pred_check_branch
          %218 = sbr.rel (%p216) target = $region24
        $region23: #{tpu_custom_call.1} parent=11 // pred_region
          _
        $region24: #{tpu_custom_call.1} parent=11 // pred_fallthru
          _
        // Predicated region
        $region25: #{tpu_custom_call.1} parent=11 // pred_check
          %p219 = pneg %p127
        $region26: #{tpu_custom_call.1} parent=11 // pred_check_branch
          %221 = sbr.rel (%p219) target = $region28
        $region27: #{tpu_custom_call.1} parent=11 // pred_region
          _
        $region28: #{tpu_custom_call.1} parent=11 // pred_fallthru
          _
        // Predicated region
        $region29: #{tpu_custom_call.1} parent=11 // pred_check
          %p222 = pneg %p148
        $region30: #{tpu_custom_call.1} parent=11 // pred_check_branch
          %224 = sbr.rel (%p222) target = $region32
        $region31: #{tpu_custom_call.1} parent=11 // pred_region
          %s226 = ssub.s32 1024, 1024
          %227 = vsyncadd [#allocation3], %s226
          %s228 = sshll.u32 [#allocation2], 4
          %s229 = int_to_ptr.vmem [resolvable:$true] %s228
          %234 = dma.hbm_to_vmem [thread:$0]  %s5, 1024, %s229, [#allocation3], 64, 64, 4
        $region32: #{tpu_custom_call.1} parent=11 // pred_fallthru
          _
        // Predicated region
        $region33: #{tpu_custom_call.1} parent=11 // pred_check
          %p235 = pneg %p169
        $region34: #{tpu_custom_call.1} parent=11 // pred_check_branch
          %237 = sbr.rel (%p235) target = $region36
        $region35: #{tpu_custom_call.1} parent=11 // pred_region
          _
        $region36: #{tpu_custom_call.1} parent=11 // pred_fallthru
          _
      $region12: #{tpu_custom_call.1} parent=5 // pred_fallthru
        _
      %p238 = scmp.lt.s32.totalorder %s17, 2
      // Predicated region
      $region37: #{tpu_custom_call.1} parent=5 // pred_check
        %p239 = pneg %p238
      $region38: #{tpu_custom_call.1} parent=5 // pred_check_branch
        %241 = sbr.rel (%p239) target = $region40
      $region39: #{tpu_custom_call.1} parent=5 // pred_region
        // Predicated region
        $region41: #{tpu_custom_call.1} parent=39 // pred_check
          %p242 = pneg %p37
        $region42: #{tpu_custom_call.1} parent=39 // pred_check_branch
          %244 = sbr.rel (%p242) target = $region44
        $region43: #{tpu_custom_call.1} parent=39 // pred_region
          %p245 = scmp.lt.s32.totalorder %s17, 1
          %s246 = scalar_select %p245, %s17, 1
          %s247 = smul.addr %s246, 8
          %s248 = smul.addr %s247, 4
          %s249 = scalar_lea.vmem %s0, %s248
        $region44: #{tpu_custom_call.1} parent=39 // pred_fallthru
          _
      $region40: #{tpu_custom_call.1} parent=5 // pred_fallthru
        _
      %p250 = scmp.le.s32.totalorder 1, %s17
      %p251 = scmp.lt.s32.totalorder %s17, 3
      %p252 = pnand %p250, %p251
      %p253 = pneg %p252
      // Predicated region
      $region45: #{tpu_custom_call.1} parent=5 // pred_check
        _
      $region46: #{tpu_custom_call.1} parent=5 // pred_check_branch
        %255 = sbr.rel (%p252) target = $region48
      $region47: #{tpu_custom_call.1} parent=5 // pred_region
        %s256 = ssub.s32 %s17, 1
        // Predicated region
        $region49: #{tpu_custom_call.1} parent=47 // pred_check
          %p257 = pneg %p148
        $region50: #{tpu_custom_call.1} parent=47 // pred_check_branch
          %259 = sbr.rel (%p257) target = $region52
        $region51: #{tpu_custom_call.1} parent=47 // pred_region
          %260 = dma.done [#allocation3], 1024
        $region52: #{tpu_custom_call.1} parent=47 // pred_fallthru
          _
        %p261 = scmp.lt.s32.totalorder %s22, 1
        %s262 = scalar_select %p261, %s22, 1
        %s263 = smul.addr %s262, 8
        %s264 = smul.addr %s263, 4
        %s265 = scalar_lea.vmem %s0, %s264
        %p266 = pneg %p43
        %p267 = pneg %p40
        %p268 = pneg %p64
        %p269 = pneg %p61
        %p270 = pneg %p85
        %p271 = pneg %p82
        %p272 = pneg %p106
        %p273 = pneg %p103
        %p274 = pneg %p127
        %p275 = pneg %p124
        %p276 = pneg %p148
        %p277 = pneg %p145
        %p278 = pneg %p169
        %p279 = pneg %p166
        %p280 = pneg %p195
        %p281 = pneg %p192
        %s282 = sand.u32 %s182, 1
        %s283 = scalar_lea.sflag [#allocation4], %s282
        %s284 = sand.u32 %s182, 1
        %s285 = smul.addr %s284, 32
        %s286 = scalar_lea.vmem [#allocation5], %s285
        %p287 = scmp.lt.s32.totalorder %s22, 1
        %s288 = scalar_select %p287, %s22, 1
        %s289 = smul.addr %s288, 8
        %s290 = smul.addr %s289, 4
        %s291 = scalar_lea.vmem %s0, %s290
        %v293 = vld [vmem:[%s291] sm:$0xf]
        %v294 = vld [vmem:[%s291 + $0x4] sm:$0xf]
        %v295 = vld [vmem:[%s291 + $0x8] sm:$0xf]
        %v296 = vld [vmem:[%s291 + $0xc] sm:$0xf]
        %v297 = vld [vmem:[%s291 + $0x10] sm:$0xf]
        %v298 = vld [vmem:[%s291 + $0x14] sm:$0xf]
        %v299 = vld [vmem:[%s291 + $0x18] sm:$0xf]
        %v300 = vld [vmem:[%s291 + $0x1c] sm:$0xf]
        %v301 = vld [vmem:[%s1] sm:$0xf]
        %v302 = vld [vmem:[%s1 + $0x4] sm:$0xf]
        %v303 = vld [vmem:[%s1 + $0x8] sm:$0xf]
        %v304 = vld [vmem:[%s1 + $0xc] sm:$0x3]
        %v305 = vld [vmem:[%s2] sm:$0x1]
        %v307 = vlaneseq
        %v308 = vshrl.u32 %v307, 7
        %v309 = vsub.s32 0, %v308
        %v310 = vrot.slane %v305, %v309
        %v320 = vunpack.c.l.b16 %v293
        %v321 = vunpack.c.l.b16 %v294
        %v322 = vunpack.c.l.b16 %v295
        %v323 = vunpack.c.l.b16 %v296
        %v324 = vunpack.c.l.b16 %v297
        %v325 = vunpack.c.l.b16 %v298
        %v326 = vunpack.c.l.b16 %v299
        %v327 = vunpack.c.l.b16 %v300
        %v328 = vpack.c.b16 %v321, %v320
        %v329 = vpack.c.b16 %v323, %v322
        %v330 = vpack.c.b16 %v325, %v324
        %v331 = vpack.c.b16 %v327, %v326
        %v336 = vunpack.c.l.b16 %v301
        %v337 = vunpack.c.l.b16 %v302
        %v338 = vunpack.c.l.b16 %v303
        %v339 = vunpack.c.l.b16 %v304
        %v340 = vpack.c.b16 %v337, %v336
        %v341 = vpack.c.b16 %v339, %v338
        %vm343 = vcmask 220160
        %v345 = vsel %vm343, %v328, 0
        %v348 = vsel %vm343, %v329, 0
        %v351 = vsel %vm343, %v330, 0
        %v354 = vsel %vm343, %v331, 0
        %vm356 = vcmask 1044480
        %vm357 = vcmask 1045504
        %v358 = vsel %vm356, 4294967295, 65535
        %v359 = vsel %vm357, %v358, 0
        %v361 = vand.u32 %v341, %v359
        %363 = vmatprep.subr.bf16.mxu0 0
        %364 = vmatpush1.bf16.msra.mxu0 %v340
        %365 = vmatprep.subr.bf16.mxu0 0
        %366 = vmatpush1.bf16.msra.mxu0 %v361
        %367 = vmatprep.subr.bf16.mxu0 0
        %368 = vmatpush1.bf16.msra.mxu0 0
        %369 = vmatprep.subr.bf16.mxu0 0
        %370 = vmatpush1.bf16.msra.mxu0 0
        %371 = vmatprep.subr.bf16.mxu0 0
        %372 = vmatpush1.bf16.msra.mxu0 0
        %373 = vmatprep.subr.bf16.mxu0 0
        %374 = vmatpush1.bf16.msra.mxu0 0
        %375 = vmatprep.subr.bf16.mxu0 0
        %376 = vmatpush1.bf16.msra.mxu0 0
        %377 = vmatprep.subr.bf16.mxu0 0
        %378 = vmatpush1.bf16.msra.mxu0 0
        %379 = vmatprep.subr.bf16.mxu0 0
        %380 = vmatpush1.bf16.msra.mxu0 0
        %381 = vmatprep.subr.bf16.mxu0 0
        %382 = vmatpush1.bf16.msra.mxu0 0
        %383 = vmatprep.subr.bf16.mxu0 0
        %384 = vmatpush1.bf16.msra.mxu0 0
        %385 = vmatprep.subr.bf16.mxu0 0
        %386 = vmatpush1.bf16.msra.mxu0 0
        %387 = vmatprep.subr.bf16.mxu0 0
        %388 = vmatpush1.bf16.msra.mxu0 0
        %389 = vmatprep.subr.bf16.mxu0 0
        %390 = vmatpush1.bf16.msra.mxu0 0
        %391 = vmatprep.subr.bf16.mxu0 0
        %392 = vmatpush1.bf16.msra.mxu0 0
        %393 = vmatprep.subr.bf16.mxu0 0
        %394 = vmatpush1.bf16.msra.mxu0 0
        %395 = vmatprep.mubr.bf16.mxu0 0
        %396 = vmatmul.mubr.bf16.gmra.mrb[0].mxu0 %v345
        %v397 = vpop.f32.mrb[0].mxu0
        %v398 = vadd.f32 %v310, %v397
        %v399 = vpop.f32.mrb[0].mxu0
        %v400 = vpop.f32.mrb[0].mxu0
        %v401 = vadd.f32 %v310, %v400
        %v402 = vpop.f32.mrb[0].mxu0
        %403 = vmatprep.mubr.bf16.mxu0 0
        %404 = vmatmul.mubr.bf16.gmra.mrb[0].mxu0 %v348
        %v405 = vpop.f32.mrb[0].mxu0
        %v406 = vadd.f32 %v310, %v405
        %v407 = vpop.f32.mrb[0].mxu0
        %v408 = vpop.f32.mrb[0].mxu0
        %v409 = vadd.f32 %v310, %v408
        %v410 = vpop.f32.mrb[0].mxu0
        %411 = vmatprep.mubr.bf16.mxu0 0
        %412 = vmatmul.mubr.bf16.gmra.mrb[0].mxu0 %v351
        %v413 = vpop.f32.mrb[0].mxu0
        %v414 = vadd.f32 %v310, %v413
        %v415 = vpop.f32.mrb[0].mxu0
        %v416 = vpop.f32.mrb[0].mxu0
        %v417 = vadd.f32 %v310, %v416
        %v418 = vpop.f32.mrb[0].mxu0
        %419 = vmatprep.mubr.bf16.mxu0 0
        %420 = vmatmul.mubr.bf16.gmra.mrb[0].mxu0 %v354
        %v421 = vpop.f32.mrb[0].mxu0
        %v422 = vadd.f32 %v310, %v421
        %v423 = vpop.f32.mrb[0].mxu0
        %v424 = vpop.f32.mrb[0].mxu0
        %v425 = vadd.f32 %v310, %v424
        %v426 = vpop.f32.mrb[0].mxu0
        %427 = vdwg.mxu0
        %v428 = vadd.f32 %v398, %v401
        %v429 = vadd.f32 %v428, %v406
        %v430 = vadd.f32 %v429, %v409
        %v431 = vadd.f32 %v430, %v414
        %v432 = vadd.f32 %v431, %v417
        %v433 = vadd.f32 %v432, %v422
        %v434 = vadd.f32 %v433, %v425
        %v435 = vrot.slane %v434, 4
        %v436 = vadd.f32 %v434, %v435
        %v437 = vrot.slane %v436, 2
        %v438 = vadd.f32 %v436, %v437
        %v439 = vrot.slane %v438, 1
        %v440 = vadd.f32 %v438, %v439
        %v441 = vmul.f32 %v440, 0.015625
        %v442 = vpack.c.bf16 %v441, %v441
        %v443 = vld [vmem:[%s3] sm:$0xf]
        %v444 = vld [vmem:[%s3 + $0x4] sm:$0xf]
        %v445 = vld [vmem:[%s3 + $0x8] sm:$0xf]
        %v446 = vld [vmem:[%s3 + $0xc] sm:$0xf]
        %v447 = vld [vmem:[%s3 + $0x10] sm:$0xf]
        %v448 = vld [vmem:[%s3 + $0x14] sm:$0xf]
        %v449 = vld [vmem:[%s3 + $0x18] sm:$0xf]
        %v450 = vld [vmem:[%s3 + $0x1c] sm:$0xf]
        %v451 = vld [vmem:[%s3 + $0x20] sm:$0xf]
        %v452 = vld [vmem:[%s3 + $0x24] sm:$0xf]
        %v453 = vld [vmem:[%s3 + $0x28] sm:$0xf]
        %v454 = vld [vmem:[%s3 + $0x2c] sm:$0xf]
        %v455 = vld [vmem:[%s3 + $0x30] sm:$0xf]
        %v456 = vld [vmem:[%s3 + $0x34] sm:$0xf]
        %v457 = vld [vmem:[%s3 + $0x38] sm:$0xf]
        %v458 = vld [vmem:[%s3 + $0x3c] sm:$0xf]
        %v459 = vld [vmem:[%s4] sm:$0x1]
        %v476 = vunpack.c.l.b16 %v443
        %v477 = vunpack.c.l.b16 %v444
        %v478 = vunpack.c.l.b16 %v445
        %v479 = vunpack.c.l.b16 %v446
        %v480 = vunpack.c.l.b16 %v447
        %v481 = vunpack.c.l.b16 %v448
        %v482 = vunpack.c.l.b16 %v449
        %v483 = vunpack.c.l.b16 %v450
        %v484 = vunpack.c.l.b16 %v451
        %v485 = vunpack.c.l.b16 %v452
        %v486 = vunpack.c.l.b16 %v453
        %v487 = vunpack.c.l.b16 %v454
        %v488 = vunpack.c.l.b16 %v455
        %v489 = vunpack.c.l.b16 %v456
        %v490 = vunpack.c.l.b16 %v457
        %v491 = vunpack.c.l.b16 %v458
        %v492 = vpack.c.b16 %v477, %v476
        %v493 = vpack.c.b16 %v479, %v478
        %v494 = vpack.c.b16 %v481, %v480
        %v495 = vpack.c.b16 %v483, %v482
        %v496 = vpack.c.b16 %v485, %v484
        %v497 = vpack.c.b16 %v487, %v486
        %v498 = vpack.c.b16 %v489, %v488
        %v499 = vpack.c.b16 %v491, %v490
        %508 = vmatprep.subr.bf16.mxu0 0
        %509 = vmatpush1.bf16.msra.mxu0 %v492
        %510 = vmatprep.subr.bf16.mxu0 0
        %511 = vmatpush1.bf16.msra.mxu0 %v493
        %512 = vmatprep.subr.bf16.mxu0 0
        %513 = vmatpush1.bf16.msra.mxu0 %v494
        %514 = vmatprep.subr.bf16.mxu0 0
        %515 = vmatpush1.bf16.msra.mxu0 %v495
        %516 = vmatprep.subr.bf16.mxu0 0
        %517 = vmatpush1.bf16.msra.mxu0 %v496
        %518 = vmatprep.subr.bf16.mxu0 0
        %519 = vmatpush1.bf16.msra.mxu0 %v497
        %520 = vmatprep.subr.bf16.mxu0 0
        %521 = vmatpush1.bf16.msra.mxu0 %v498
        %522 = vmatprep.subr.bf16.mxu0 0
        %523 = vmatpush1.bf16.msra.mxu0 %v499
        %524 = vmatprep.subr.bf16.mxu0 0
        %525 = vmatpush1.bf16.msra.mxu0 0
        %526 = vmatprep.subr.bf16.mxu0 0
        %527 = vmatpush1.bf16.msra.mxu0 0
        %528 = vmatprep.subr.bf16.mxu0 0
        %529 = vmatpush1.bf16.msra.mxu0 0
        %530 = vmatprep.subr.bf16.mxu0 0
        %531 = vmatpush1.bf16.msra.mxu0 0
        %532 = vmatprep.subr.bf16.mxu0 0
        %533 = vmatpush1.bf16.msra.mxu0 0
        %534 = vmatprep.subr.bf16.mxu0 0
        %535 = vmatpush1.bf16.msra.mxu0 0
        %536 = vmatprep.subr.bf16.mxu0 0
        %537 = vmatpush1.bf16.msra.mxu0 0
        %538 = vmatprep.subr.bf16.mxu0 0
        %539 = vmatpush1.bf16.msra.mxu0 0
        %540 = vmatprep.mubr.bf16.mxu0 0
        %541 = vmatmul.mubr.bf16.gmra.mrb[0].mxu0 %v442
        %v542 = vpop.f32.mrb[0].mxu0
        %v543 = vadd.f32 %v459, %v542
        %v544 = vpop.f32.mrb[0].mxu0
        %v545 = vpop.f32.mrb[0].mxu0
        %v546 = vpop.f32.mrb[0].mxu0
        %547 = vdwg.mxu0
        %v548 = vmax.f32 %v543, 0.0
        %v549 = vpack.c.bf16 %v548, %v548
        %v550 = vld [vmem:[#allocation2] sm:$0xf]
        %v551 = vld [vmem:[#allocation2 + $0x4] sm:$0xf]
        %v552 = vld [vmem:[#allocation2 + $0x8] sm:$0xf]
        %v553 = vld [vmem:[#allocation2 + $0xc] sm:$0xf]
        %v554 = vld [vmem:[#allocation2 + $0x10] sm:$0xf]
        %v555 = vld [vmem:[#allocation2 + $0x14] sm:$0xf]
        %v556 = vld [vmem:[#allocation2 + $0x18] sm:$0xf]
        %v557 = vld [vmem:[#allocation2 + $0x1c] sm:$0xf]
        %v558 = vld [vmem:[#allocation2 + $0x20] sm:$0xf]
        %v559 = vld [vmem:[#allocation2 + $0x24] sm:$0xf]
        %v560 = vld [vmem:[#allocation2 + $0x28] sm:$0xf]
        %v561 = vld [vmem:[#allocation2 + $0x2c] sm:$0xf]
        %v562 = vld [vmem:[#allocation2 + $0x30] sm:$0xf]
        %v563 = vld [vmem:[#allocation2 + $0x34] sm:$0xf]
        %v564 = vld [vmem:[#allocation2 + $0x38] sm:$0xf]
        %v565 = vld [vmem:[#allocation2 + $0x3c] sm:$0xf]
        %v566 = vld [vmem:[%s6] sm:$0x1]
        %v583 = vunpack.c.l.b16 %v550
        %v584 = vunpack.c.l.b16 %v551
        %v585 = vunpack.c.l.b16 %v552
        %v586 = vunpack.c.l.b16 %v553
        %v587 = vunpack.c.l.b16 %v554
        %v588 = vunpack.c.l.b16 %v555
        %v589 = vunpack.c.l.b16 %v556
        %v590 = vunpack.c.l.b16 %v557
        %v591 = vunpack.c.l.b16 %v558
        %v592 = vunpack.c.l.b16 %v559
        %v593 = vunpack.c.l.b16 %v560
        %v594 = vunpack.c.l.b16 %v561
        %v595 = vunpack.c.l.b16 %v562
        %v596 = vunpack.c.l.b16 %v563
        %v597 = vunpack.c.l.b16 %v564
        %v598 = vunpack.c.l.b16 %v565
        %v599 = vpack.c.b16 %v584, %v583
        %v600 = vpack.c.b16 %v586, %v585
        %v601 = vpack.c.b16 %v588, %v587
        %v602 = vpack.c.b16 %v590, %v589
        %v603 = vpack.c.b16 %v592, %v591
        %v604 = vpack.c.b16 %v594, %v593
        %v605 = vpack.c.b16 %v596, %v595
        %v606 = vpack.c.b16 %v598, %v597
        %615 = vmatprep.subr.bf16.mxu0 0
        %616 = vmatpush1.bf16.msra.mxu0 %v599
        %617 = vmatprep.subr.bf16.mxu0 0
        %618 = vmatpush1.bf16.msra.mxu0 %v600
        %619 = vmatprep.subr.bf16.mxu0 0
        %620 = vmatpush1.bf16.msra.mxu0 %v601
        %621 = vmatprep.subr.bf16.mxu0 0
        %622 = vmatpush1.bf16.msra.mxu0 %v602
        %623 = vmatprep.subr.bf16.mxu0 0
        %624 = vmatpush1.bf16.msra.mxu0 %v603
        %625 = vmatprep.subr.bf16.mxu0 0
        %626 = vmatpush1.bf16.msra.mxu0 %v604
        %627 = vmatprep.subr.bf16.mxu0 0
        %628 = vmatpush1.bf16.msra.mxu0 %v605
        %629 = vmatprep.subr.bf16.mxu0 0
        %630 = vmatpush1.bf16.msra.mxu0 %v606
        %631 = vmatprep.subr.bf16.mxu0 0
        %632 = vmatpush1.bf16.msra.mxu0 0
        %633 = vmatprep.subr.bf16.mxu0 0
        %634 = vmatpush1.bf16.msra.mxu0 0
        %635 = vmatprep.subr.bf16.mxu0 0
        %636 = vmatpush1.bf16.msra.mxu0 0
        %637 = vmatprep.subr.bf16.mxu0 0
        %638 = vmatpush1.bf16.msra.mxu0 0
        %639 = vmatprep.subr.bf16.mxu0 0
        %640 = vmatpush1.bf16.msra.mxu0 0
        %641 = vmatprep.subr.bf16.mxu0 0
        %642 = vmatpush1.bf16.msra.mxu0 0
        %643 = vmatprep.subr.bf16.mxu0 0
        %644 = vmatpush1.bf16.msra.mxu0 0
        %645 = vmatprep.subr.bf16.mxu0 0
        %646 = vmatpush1.bf16.msra.mxu0 0
        %647 = vmatprep.mubr.bf16.mxu0 0
        %648 = vmatmul.mubr.bf16.gmra.mrb[0].mxu0 %v549
        %v649 = vpop.f32.mrb[0].mxu0
        %v650 = vadd.f32 %v566, %v649
        %v651 = vpop.f32.mrb[0].mxu0
        %v652 = vpop.f32.mrb[0].mxu0
        %v653 = vpop.f32.mrb[0].mxu0
        %654 = vdwg.mxu0
        %v655 = vsub.f32 0.0, %v650
        %v656 = vmul.f32 %v655, 1.442695
        %v657 = vpow.pop %v656
        %v658 = vadd.f32 %v657, 1.0
        %v659 = vrcp.pop %v658
        %v660 = vmul.f32 1.0, %v659
        %v661 = vlaneseq
        %v662 = vshrl.u32 %v661, 7
        %v663 = vsub.s32 0, %v662
        %v664 = vrot.slane %v660, %v663
        %v665 = vmul.f32 %v398, %v664
        %v666 = vmul.f32 %v401, %v664
        %v667 = vmul.f32 %v406, %v664
        %v668 = vmul.f32 %v409, %v664
        %v669 = vmul.f32 %v414, %v664
        %v670 = vmul.f32 %v417, %v664
        %v671 = vmul.f32 %v422, %v664
        %v672 = vmul.f32 %v425, %v664
        %v673 = vmax.f32 %v665, 0.0
        %v674 = vmax.f32 %v666, 0.0
        %v675 = vmax.f32 %v667, 0.0
        %v676 = vmax.f32 %v668, 0.0
        %v677 = vmax.f32 %v669, 0.0
        %v678 = vmax.f32 %v670, 0.0
        %v679 = vmax.f32 %v671, 0.0
        %v680 = vmax.f32 %v672, 0.0
        %v681 = vpack.c.bf16 %v674, %v673
        %v682 = vpack.c.bf16 %v676, %v675
        %v683 = vpack.c.bf16 %v678, %v677
        %v684 = vpack.c.bf16 %v680, %v679
        %v689 = vunpack.c.l.b16 %v681
        %v690 = vunpack.c.h.b16 %v681
        %v691 = vunpack.c.l.b16 %v682
        %v692 = vunpack.c.h.b16 %v682
        %v693 = vunpack.c.l.b16 %v683
        %v694 = vunpack.c.h.b16 %v683
        %v695 = vunpack.c.l.b16 %v684
        %v696 = vunpack.c.h.b16 %v684
        %v697 = vpack.c.b16 %v689, %v689
        %v698 = vpack.c.b16 %v690, %v690
        %v699 = vpack.c.b16 %v691, %v691
        %v700 = vpack.c.b16 %v692, %v692
        %v701 = vpack.c.b16 %v693, %v693
        %v702 = vpack.c.b16 %v694, %v694
        %v703 = vpack.c.b16 %v695, %v695
        %v704 = vpack.c.b16 %v696, %v696
        %713 = vst [vmem:[%s286] sm:$0xf] %v697
        %714 = vst [vmem:[%s286 + $0x4] sm:$0xf] %v698
        %715 = vst [vmem:[%s286 + $0x8] sm:$0xf] %v699
        %716 = vst [vmem:[%s286 + $0xc] sm:$0xf] %v700
        %717 = vst [vmem:[%s286 + $0x10] sm:$0xf] %v701
        %718 = vst [vmem:[%s286 + $0x14] sm:$0xf] %v702
        %719 = vst [vmem:[%s286 + $0x18] sm:$0xf] %v703
        %720 = vst [vmem:[%s286 + $0x1c] sm:$0xf] %v704
        %s721 = sand.u32 %s182, 1
        %s722 = scalar_lea.sflag [#allocation4], %s721
        %s723 = sand.u32 %s182, 1
        %s724 = smul.addr %s723, 32
        %s725 = scalar_lea.vmem [#allocation5], %s724
        // Predicated region
        $region53: #{tpu_custom_call.1} parent=47 // pred_check
          %p726 = pneg %p192
        $region54: #{tpu_custom_call.1} parent=47 // pred_check_branch
          %728 = sbr.rel (%p726) target = $region56
        $region55: #{tpu_custom_call.1} parent=47 // pred_region
          %s730 = ssub.s32 512, 512
          %731 = vsyncadd %s722, %s730
          %s732 = smul.addr %s22, 8
          %s733 = smul.addr %s732, 64
          %s734 = scalar_lea.hbm %s7, %s733
          %s735 = sshll.u32 %s725, 4
          %s736 = int_to_ptr.vmem [resolvable:$true] %s735
          %741 = dma.vmem_to_hbm [thread:$0]  %s736, 512, %s734, %s722, 64, 64, 4
        $region56: #{tpu_custom_call.1} parent=47 // pred_fallthru
          _
      $region48: #{tpu_custom_call.1} parent=5 // pred_fallthru
        _
      %p742 = scmp.le.s32.totalorder 2, %s17
      // Predicated region
      $region57: #{tpu_custom_call.1} parent=5 // pred_check
        %p743 = pneg %p742
      $region58: #{tpu_custom_call.1} parent=5 // pred_check_branch
        %745 = sbr.rel (%p743) target = $region60
      $region59: #{tpu_custom_call.1} parent=5 // pred_region
        %s746 = ssub.s32 %s17, 2
        // Predicated region
        $region61: #{tpu_custom_call.1} parent=59 // pred_check
          %p747 = pneg %p198
        $region62: #{tpu_custom_call.1} parent=59 // pred_check_branch
          %749 = sbr.rel (%p747) target = $region64
        $region63: #{tpu_custom_call.1} parent=59 // pred_region
          %s750 = sand.u32 %s183, 1
          %s751 = scalar_lea.sflag [#allocation4], %s750
          %s752 = sand.u32 %s183, 1
          %s753 = smul.addr %s752, 32
          %s754 = scalar_lea.vmem [#allocation5], %s753
          %755 = dma.done %s751, 512
        $region64: #{tpu_custom_call.1} parent=59 // pred_fallthru
          _
      $region60: #{tpu_custom_call.1} parent=5 // pred_fallthru
        _
    $region6: #{tpu_custom_call.1} parent=1 // loop_footer
      %s21 = sadd.s32 1, %s17
    $region7: #{tpu_custom_call.1} parent=1 // loop_footer_branch
      %16 = sbr.rel target = $region3
    $region8: #{tpu_custom_call.1} parent=1 // loop_exit
      _
    %756 = vsyncpa [#allocation3], 1
    %s757 = scalar_lea.sflag [#allocation3], 1
    %758 = vsyncpa %s757, 1
    %759 = vsyncpa [#allocation4], 1
    %s760 = scalar_lea.sflag [#allocation4], 1
    %761 = vsyncpa %s760, 1

</llo_original>
